<compile_context>
chip_gen: v7x
topology: tpu7x:2x2x1
jax: 0.10.0
libtpu: 0.0.40
codegen_flags: <defaults>
</compile_context>

<pallas_src>
import functools

import jax
import jax.numpy as jnp
from jax import lax
from jax.experimental import pallas as pl
from jax.experimental.pallas import tpu as pltpu


# ----------------------------- kernel bodies -------------------------------

def _body_3d(x_ref, w_ref, b_ref, o_ref):
    # x_ref: (G, TB, in)  w_ref: (G, out, in)  b_ref: (G, 1, out)|None
    # o_ref: (G, TB, out)
    # einsum 'gbi,goi->gbo': group is the MXU batch dim, contraction on the
    # last dim of BOTH operands -> the transposed RHS is consumed natively.
    y = lax.dot_general(
        x_ref[...], w_ref[...],
        dimension_numbers=(((2,), (2,)), ((0,), (0,))),
        preferred_element_type=jnp.float32)                        # (G, TB, out)
    if b_ref is not None:
        y = y + b_ref[...].astype(jnp.float32)                     # (G, 1, out) bcast
    o_ref[...] = y.astype(o_ref.dtype)


def _kernel_3d_bias(x_ref, w_ref, b_ref, o_ref):
    _body_3d(x_ref, w_ref, b_ref, o_ref)


def _kernel_3d_nobias(x_ref, w_ref, o_ref):
    _body_3d(x_ref, w_ref, None, o_ref)


def _body_2d(x_ref, w_ref, b_ref, o_ref, *, group, in_features):
    # x_ref: (TB, G*in) -- member g's columns live at [g*in, (g+1)*in)
    # w_ref: (G, out, in)  b_ref: (G, 1, out)|None  o_ref: (G, TB, out)
    for g in range(group):                                         # static unroll
        xg = x_ref[:, g * in_features:(g + 1) * in_features]       # (TB, in)
        y = lax.dot_general(
            xg, w_ref[g],
            dimension_numbers=(((1,), (1,)), ((), ())),
            preferred_element_type=jnp.float32)                    # (TB, out)
        if b_ref is not None:
            y = y + b_ref[g].astype(jnp.float32)                   # (1, out) bcast
        o_ref[g] = y.astype(o_ref.dtype)


def _kernel_2d_bias(x_ref, w_ref, b_ref, o_ref, *, group, in_features):
    _body_2d(x_ref, w_ref, b_ref, o_ref, group=group, in_features=in_features)


def _kernel_2d_nobias(x_ref, w_ref, o_ref, *, group, in_features):
    _body_2d(x_ref, w_ref, None, o_ref, group=group, in_features=in_features)


# ----------------------------- tiling heuristics ---------------------------

def _choose_batch_tile(B, cap=1024):
    """Batch tile: full B when small, else largest multiple-of-8 divisor <= cap."""
    if B <= cap:
        return B
    for tb in range(cap, 7, -8):
        if B % tb == 0:
            return tb
    return B  # fallback: full batch (block dim equals full array dim -> legal)


def _choose_group(n, per_member_bytes, valid, max_group=8, budget=12 << 20):
    """Largest member-group size G dividing n, passing `valid`, keeping the
    double-buffered per-step working set under `budget` bytes."""
    cands = [g for g in range(1, min(n, max_group) + 1)
             if n % g == 0 and valid(g)]
    if not cands:
        return None
    fit = [g for g in cands if 2 * g * per_member_bytes <= budget]
    return max(fit) if fit else min(cands)


# ----------------------------- public entry --------------------------------

def linear_nd_forward(x, weight, bias=None):
    """Pallas implementation of LinearND.forward.

    x      : (n, B, in_features)  or  (B, n * in_features)
    weight : (n, out_features, in_features)
    bias   : (n, out_features) or None
    returns: (n, B, out_features)
    """
    n, out_f, in_f = weight.shape
    itemsize = jnp.dtype(x.dtype).itemsize

    x_is_2d = (x.ndim == 2)
    if x_is_2d:
        B = x.shape[0]
        assert x.shape[1] == n * in_f, "2D input must have n * in_features columns"
    else:
        assert x.ndim == 3 and x.shape[0] == n and x.shape[2] == in_f
        B = x.shape[1]

    TB = _choose_batch_tile(B)
    per_member_bytes = (TB * in_f + out_f * in_f + out_f + TB * out_f) * itemsize

    G = None
    if x_is_2d:
        # Lane-dim block width must be a multiple of 128 or the full row width.
        G = _choose_group(
            n, per_member_bytes,
            valid=lambda g: (g == n) or (g * in_f) % 128 == 0)
        if G is None:
            # No lane-legal column block: pay one HBM pass to go member-major.
            x = x.reshape(B, n, in_f).transpose(1, 0, 2)
            x_is_2d = False
    if not x_is_2d:
        G = _choose_group(n, per_member_bytes, valid=lambda g: True)

    # Member-groups outer, batch tiles inner: weight tile re-used across the
    # whole inner batch sweep (index map constant along the inner axis).
    grid = (n // G, B // TB)

    if x_is_2d:
        x_spec = pl.BlockSpec((TB, G * in_f), lambda m, b: (b, m))
    else:
        x_spec = pl.BlockSpec((G, TB, in_f), lambda m, b: (m, b, 0))
    w_spec = pl.BlockSpec((G, out_f, in_f), lambda m, b: (m, 0, 0))
    o_spec = pl.BlockSpec((G, TB, out_f), lambda m, b: (m, b, 0))

    in_specs = [x_spec, w_spec]
    operands = [x, weight]
    if bias is not None:
        in_specs.append(pl.BlockSpec((G, 1, out_f), lambda m, b: (m, 0, 0)))
        operands.append(bias.reshape(n, 1, out_f))

    if x_is_2d:
        kernel = functools.partial(
            _kernel_2d_bias if bias is not None else _kernel_2d_nobias,
            group=G, in_features=in_f)
    else:
        kernel = _kernel_3d_bias if bias is not None else _kernel_3d_nobias

    # TODO(synk): for very large in/out_features add K/N tiling with an f32 VMEM
    # accumulator (pl.when init/finalize, 'arbitrary' k-axis) so full-member
    # weight blocks need not fit double-buffered in VMEM (matters on v7x 64 MiB).
    return pl.pallas_call(
        kernel,
        out_shape=jax.ShapeDtypeStruct((n, B, out_f), x.dtype),
        grid_spec=pltpu.PrefetchScalarGridSpec(
            num_scalar_prefetch=0,
            grid=grid,
            in_specs=in_specs,
            out_specs=o_spec,
        ),
        compiler_params=pltpu.CompilerParams(
            dimension_semantics=("parallel", "parallel"),
        ),
    )(*operands)


# ----------------------------- demo / self-test -----------------------------

if __name__ == "__main__":
    # Small shapes consistent with the module: multiplicity n=4, in=out=32, batch=8.
    n = 4
    in_features = 32
    out_features = 32
    batch = 8

    key = jax.random.PRNGKey(0)
    k_w, k_b, k_x = jax.random.split(key, 3)

    # "nn.Linear"-style params, repeated n times like LinearND.__init__.
    bound = 1.0 / (in_features ** 0.5)
    base_weight = jax.random.uniform(
        k_w, (out_features, in_features), jnp.float32, -bound, bound)
    base_bias = jax.random.uniform(
        k_b, (out_features,), jnp.float32, -bound, bound)
    weight = jnp.tile(base_weight[None], (n, 1, 1))          # (n, out, in)
    bias = jnp.tile(base_bias[None], (n, 1))                 # (n, out)

    # 2D input (exercises the transpose-free 2D path): (B, n * in_features)
    x2d = jax.random.normal(k_x, (batch, n * in_features), jnp.float32)
    # Equivalent member-major 3D input: (n, B, in_features)
    x3d = x2d.reshape(batch, n, in_features).transpose(1, 0, 2)

    ref_bias = jnp.einsum("nbi,noi->nbo", x3d, weight) + bias[:, None, :]
    ref_nobias = jnp.einsum("nbi,noi->nbo", x3d, weight)

    out_2d = jax.block_until_ready(linear_nd_forward(x2d, weight, bias))
    out_3d = jax.block_until_ready(linear_nd_forward(x3d, weight, bias))
    out_nb = jax.block_until_ready(linear_nd_forward(x3d, weight, None))

    assert out_2d.shape == (n, batch, out_features)
    assert out_3d.shape == (n, batch, out_features)
    assert jnp.allclose(out_2d, ref_bias, atol=1e-5, rtol=1e-5)
    assert jnp.allclose(out_3d, ref_bias, atol=1e-5, rtol=1e-5)
    assert jnp.allclose(out_nb, ref_nobias, atol=1e-5, rtol=1e-5)

    print("KERNEL_OK")
</pallas_src>

<mosaic_0001>
module attributes {stable_mosaic.version = 11 : i64} {
  func.func @_kernel_2d_bias(%arg0: i32, %arg1: i32, %arg2: memref<8x128xf32, #tpu.memory_space<vmem>>, %arg3: memref<4x32x32xf32, #tpu.memory_space<vmem>>, %arg4: memref<4x1x32xf32, #tpu.memory_space<vmem>>, %arg5: memref<4x8x32xf32, #tpu.memory_space<vmem>>) attributes {dimension_semantics = [#tpu.dimension_semantics<parallel>, #tpu.dimension_semantics<parallel>], iteration_bounds = array<i64: 1, 1>, scalar_prefetch = 0 : i64, scratch_operands = 0 : i64, tpu.core_type = #tpu.core_type<tc>, window_params = [{transform_indices = @transform_0, window_bounds = array<i64: 8, 128>}, {transform_indices = @transform_1, window_bounds = array<i64: 4, 32, 32>}, {transform_indices = @transform_2, window_bounds = array<i64: 4, 1, 32>}, {transform_indices = @transform_3, window_bounds = array<i64: 4, 8, 32>}]} {
    %c0 = arith.constant 0 : index
    %c0_0 = arith.constant 0 : index
    %0 = vector.load %arg2[%c0, %c0_0] : memref<8x128xf32, #tpu.memory_space<vmem>>, vector<8x32xf32>
    %c0_1 = arith.constant 0 : index
    %c0_2 = arith.constant 0 : index
    %c0_3 = arith.constant 0 : index
    %1 = vector.load %arg3[%c0_1, %c0_2, %c0_3] : memref<4x32x32xf32, #tpu.memory_space<vmem>>, vector<1x32x32xf32>
    %2 = vector.shape_cast %1 : vector<1x32x32xf32> to vector<32x32xf32>
    %cst = arith.constant dense<0.000000e+00> : vector<8x32xf32>
    %3 = tpu.matmul %0, %2, %cst {dimension_numbers = #tpu.dot_dimension_numbers<[1], [1], [0], [0], [0, 0, 1, 0], [], []>} : vector<8x32xf32>, vector<32x32xf32>, vector<8x32xf32> -> vector<8x32xf32>
    %c0_4 = arith.constant 0 : index
    %c0_5 = arith.constant 0 : index
    %c0_6 = arith.constant 0 : index
    %4 = vector.load %arg4[%c0_4, %c0_5, %c0_6] : memref<4x1x32xf32, #tpu.memory_space<vmem>>, vector<1x1x32xf32>
    %5 = vector.shape_cast %4 : vector<1x1x32xf32> to vector<1x32xf32>
    %6 = vector.broadcast %5 : vector<1x32xf32> to vector<8x32xf32>
    %7 = arith.addf %3, %6 : vector<8x32xf32>
    %c0_7 = arith.constant 0 : index
    %c0_8 = arith.constant 0 : index
    %c0_9 = arith.constant 0 : index
    %8 = vector.load %arg5[%c0_7, %c0_8, %c0_9] : memref<4x8x32xf32, #tpu.memory_space<vmem>>, vector<1x8x32xf32>
    %9 = vector.shape_cast %8 : vector<1x8x32xf32> to vector<8x32xf32>
    %10 = vector.shape_cast %7 : vector<8x32xf32> to vector<1x8x32xf32>
    tpu.vector_store %arg5[%c0_7, %c0_8, %c0_9], %10 {strides = array<i32>} : memref<4x8x32xf32, #tpu.memory_space<vmem>>, vector<1x8x32xf32>,
    %c0_10 = arith.constant 0 : index
    %c32 = arith.constant 32 : index
    %11 = vector.load %arg2[%c0_10, %c32] : memref<8x128xf32, #tpu.memory_space<vmem>>, vector<8x32xf32>
    %c1 = arith.constant 1 : index
    %c0_11 = arith.constant 0 : index
    %c0_12 = arith.constant 0 : index
    %12 = vector.load %arg3[%c1, %c0_11, %c0_12] : memref<4x32x32xf32, #tpu.memory_space<vmem>>, vector<1x32x32xf32>
    %13 = vector.shape_cast %12 : vector<1x32x32xf32> to vector<32x32xf32>
    %cst_13 = arith.constant dense<0.000000e+00> : vector<8x32xf32>
    %14 = tpu.matmul %11, %13, %cst_13 {dimension_numbers = #tpu.dot_dimension_numbers<[1], [1], [0], [0], [0, 0, 1, 0], [], []>} : vector<8x32xf32>, vector<32x32xf32>, vector<8x32xf32> -> vector<8x32xf32>
    %c1_14 = arith.constant 1 : index
    %c0_15 = arith.constant 0 : index
    %c0_16 = arith.constant 0 : index
    %15 = vector.load %arg4[%c1_14, %c0_15, %c0_16] : memref<4x1x32xf32, #tpu.memory_space<vmem>>, vector<1x1x32xf32>
    %16 = vector.shape_cast %15 : vector<1x1x32xf32> to vector<1x32xf32>
    %17 = vector.broadcast %16 : vector<1x32xf32> to vector<8x32xf32>
    %18 = arith.addf %14, %17 : vector<8x32xf32>
    %c1_17 = arith.constant 1 : index
    %c0_18 = arith.constant 0 : index
    %c0_19 = arith.constant 0 : index
    %19 = vector.load %arg5[%c1_17, %c0_18, %c0_19] : memref<4x8x32xf32, #tpu.memory_space<vmem>>, vector<1x8x32xf32>
    %20 = vector.shape_cast %19 : vector<1x8x32xf32> to vector<8x32xf32>
    %21 = vector.shape_cast %18 : vector<8x32xf32> to vector<1x8x32xf32>
    tpu.vector_store %arg5[%c1_17, %c0_18, %c0_19], %21 {strides = array<i32>} : memref<4x8x32xf32, #tpu.memory_space<vmem>>, vector<1x8x32xf32>,
    %c0_20 = arith.constant 0 : index
    %c64 = arith.constant 64 : index
    %22 = vector.load %arg2[%c0_20, %c64] : memref<8x128xf32, #tpu.memory_space<vmem>>, vector<8x32xf32>
    %c2 = arith.constant 2 : index
    %c0_21 = arith.constant 0 : index
    %c0_22 = arith.constant 0 : index
    %23 = vector.load %arg3[%c2, %c0_21, %c0_22] : memref<4x32x32xf32, #tpu.memory_space<vmem>>, vector<1x32x32xf32>
    %24 = vector.shape_cast %23 : vector<1x32x32xf32> to vector<32x32xf32>
    %cst_23 = arith.constant dense<0.000000e+00> : vector<8x32xf32>
    %25 = tpu.matmul %22, %24, %cst_23 {dimension_numbers = #tpu.dot_dimension_numbers<[1], [1], [0], [0], [0, 0, 1, 0], [], []>} : vector<8x32xf32>, vector<32x32xf32>, vector<8x32xf32> -> vector<8x32xf32>
    %c2_24 = arith.constant 2 : index
    %c0_25 = arith.constant 0 : index
    %c0_26 = arith.constant 0 : index
    %26 = vector.load %arg4[%c2_24, %c0_25, %c0_26] : memref<4x1x32xf32, #tpu.memory_space<vmem>>, vector<1x1x32xf32>
    %27 = vector.shape_cast %26 : vector<1x1x32xf32> to vector<1x32xf32>
    %28 = vector.broadcast %27 : vector<1x32xf32> to vector<8x32xf32>
    %29 = arith.addf %25, %28 : vector<8x32xf32>
    %c2_27 = arith.constant 2 : index
    %c0_28 = arith.constant 0 : index
    %c0_29 = arith.constant 0 : index
    %30 = vector.load %arg5[%c2_27, %c0_28, %c0_29] : memref<4x8x32xf32, #tpu.memory_space<vmem>>, vector<1x8x32xf32>
    %31 = vector.shape_cast %30 : vector<1x8x32xf32> to vector<8x32xf32>
    %32 = vector.shape_cast %29 : vector<8x32xf32> to vector<1x8x32xf32>
    tpu.vector_store %arg5[%c2_27, %c0_28, %c0_29], %32 {strides = array<i32>} : memref<4x8x32xf32, #tpu.memory_space<vmem>>, vector<1x8x32xf32>,
    %c0_30 = arith.constant 0 : index
    %c96 = arith.constant 96 : index
    %33 = vector.load %arg2[%c0_30, %c96] : memref<8x128xf32, #tpu.memory_space<vmem>>, vector<8x32xf32>
    %c3 = arith.constant 3 : index
    %c0_31 = arith.constant 0 : index
    %c0_32 = arith.constant 0 : index
    %34 = vector.load %arg3[%c3, %c0_31, %c0_32] : memref<4x32x32xf32, #tpu.memory_space<vmem>>, vector<1x32x32xf32>
    %35 = vector.shape_cast %34 : vector<1x32x32xf32> to vector<32x32xf32>
    %cst_33 = arith.constant dense<0.000000e+00> : vector<8x32xf32>
    %36 = tpu.matmul %33, %35, %cst_33 {dimension_numbers = #tpu.dot_dimension_numbers<[1], [1], [0], [0], [0, 0, 1, 0], [], []>} : vector<8x32xf32>, vector<32x32xf32>, vector<8x32xf32> -> vector<8x32xf32>
    %c3_34 = arith.constant 3 : index
    %c0_35 = arith.constant 0 : index
    %c0_36 = arith.constant 0 : index
    %37 = vector.load %arg4[%c3_34, %c0_35, %c0_36] : memref<4x1x32xf32, #tpu.memory_space<vmem>>, vector<1x1x32xf32>
    %38 = vector.shape_cast %37 : vector<1x1x32xf32> to vector<1x32xf32>
    %39 = vector.broadcast %38 : vector<1x32xf32> to vector<8x32xf32>
    %40 = arith.addf %36, %39 : vector<8x32xf32>
    %c3_37 = arith.constant 3 : index
    %c0_38 = arith.constant 0 : index
    %c0_39 = arith.constant 0 : index
    %41 = vector.load %arg5[%c3_37, %c0_38, %c0_39] : memref<4x8x32xf32, #tpu.memory_space<vmem>>, vector<1x8x32xf32>
    %42 = vector.shape_cast %41 : vector<1x8x32xf32> to vector<8x32xf32>
    %43 = vector.shape_cast %40 : vector<8x32xf32> to vector<1x8x32xf32>
    tpu.vector_store %arg5[%c3_37, %c0_38, %c0_39], %43 {strides = array<i32>} : memref<4x8x32xf32, #tpu.memory_space<vmem>>, vector<1x8x32xf32>,
    return
  }
  func.func @transform_0(%arg0: i32, %arg1: i32) -> (i32, i32) {
    %c0_i32 = arith.constant 0 : i32
    return %arg1, %arg0 : i32, i32
  }
  func.func @transform_1(%arg0: i32, %arg1: i32) -> (i32, i32, i32) {
    %c0_i32 = arith.constant 0 : i32
    %c0_i32_0 = arith.constant 0 : i32
    %c0_i32_1 = arith.constant 0 : i32
    return %arg0, %c0_i32, %c0_i32_0 : i32, i32, i32
  }
  func.func @transform_2(%arg0: i32, %arg1: i32) -> (i32, i32, i32) {
    %c0_i32 = arith.constant 0 : i32
    %c0_i32_0 = arith.constant 0 : i32
    %c0_i32_1 = arith.constant 0 : i32
    return %arg0, %c0_i32, %c0_i32_0 : i32, i32, i32
  }
  func.func @transform_3(%arg0: i32, %arg1: i32) -> (i32, i32, i32) {
    %c0_i32 = arith.constant 0 : i32
    %c0_i32_0 = arith.constant 0 : i32
    return %arg0, %arg1, %c0_i32 : i32, i32, i32
  }
}

</mosaic_0001>

<llo_original>
// kernel: tpu_custom_call.1
$region0: #{tpu_custom_call.1}
  #allocation0 [shape = 'u32[]', space=smem, size = 0x4, offset = 0x4, fixed_abs, tag = 'smem constant byte address 0x4 - core index']
  #allocation1 [shape = 'u32[144,128]{1,0:T(1,128)}', space=vmem, size = 0x12000, scoped, tag = 'internal scratch']
  %s0 = inlined_call_operand.hbm [shape: f32[8,128], index: 0, kind: input, shape index: {}]
  %s1 = inlined_call_operand.hbm [shape: f32[4,32,32], index: 1, kind: input, shape index: {}]
  %s2 = inlined_call_operand.vmem [shape: f32[4,1,32], index: 2, kind: input, shape index: {}]
  %s3 = inlined_call_operand.hbm [shape: f32[4,8,32], index: 3, kind: output, shape index: {}]
  %s4 = sld [smem:[#allocation0]]
  $region30: #{tpu_custom_call.1} parent=0
    _
  %s6 = ssub.s32 1, %s4
  %s7 = scalar_select 0, %s6, %s4
  $region1: #{tpu_custom_call.1} parent=0
    #allocation2 [shape = 'u8[4096]{0}', space=vmem, size = 0x1000, scoped, tag = 'input window, operand 0, single buffered']
    #allocation3 [shape = 's32[1]{0}', space=sflag, size = 0x4, scoped, tag = 'scoped memory for tpu_custom_call.1']
    #allocation4 [shape = 's32[1]{0}', space=sflag, size = 0x4, scoped, tag = 'scoped memory for tpu_custom_call.1']
    #allocation5 [shape = 'u8[65536]{0}', space=vmem, size = 0x10000, scoped, tag = 'input window, operand 1, single buffered']
    #allocation6 [shape = 's32[1]{0}', space=sflag, size = 0x4, scoped, tag = 'scoped memory for tpu_custom_call.1']
    #allocation7 [shape = 'u8[16384]{0}', space=vmem, size = 0x4000, scoped, tag = 'output window, operand 0, single buffered']
    %8 = vsyncpa [#allocation3], 0
    %9 = vsyncpa [#allocation6], 0
    %10 = vsyncpa [#allocation4], 0
    // Predicated region
    $region2: #{tpu_custom_call.1} parent=1 // pred_check
      _
    $region3: #{tpu_custom_call.1} parent=1 // pred_check_branch
      %12 = sbr.rel (0) target = $region5
    $region4: #{tpu_custom_call.1} parent=1 // pred_region
      %s14 = ssub.s32 128, 128
      %15 = vsyncadd [#allocation3], %s14
      %s17 = sshll.u32 [#allocation2], 4
      %s18 = int_to_ptr.vmem [resolvable:$true] %s17
      %20 = dma.hbm_to_vmem [thread:$0]  %s0, 128, %s18, [#allocation3]
    $region5: #{tpu_custom_call.1} parent=1 // pred_fallthru
      _
    // Predicated region
    $region6: #{tpu_custom_call.1} parent=1 // pred_check
      _
    $region7: #{tpu_custom_call.1} parent=1 // pred_check_branch
      %22 = sbr.rel (0) target = $region9
    $region8: #{tpu_custom_call.1} parent=1 // pred_region
      %s24 = ssub.s32 2048, 2048
      %25 = vsyncadd [#allocation6], %s24
      %s26 = sshll.u32 [#allocation5], 4
      %s27 = int_to_ptr.vmem [resolvable:$true] %s26
      %32 = dma.hbm_to_vmem [thread:$0]  %s1, 2048, %s27, [#allocation6], 128, 128, 8
    $region9: #{tpu_custom_call.1} parent=1 // pred_fallthru
      _
    // Predicated region
    $region10: #{tpu_custom_call.1} parent=1 // pred_check
      _
    $region11: #{tpu_custom_call.1} parent=1 // pred_check_branch
      %34 = sbr.rel (0) target = $region13
    $region12: #{tpu_custom_call.1} parent=1 // pred_region
      _
    $region13: #{tpu_custom_call.1} parent=1 // pred_fallthru
      _
    // Predicated region
    $region14: #{tpu_custom_call.1} parent=1 // pred_check
      _
    $region15: #{tpu_custom_call.1} parent=1 // pred_check_branch
      %36 = sbr.rel (0) target = $region17
    $region16: #{tpu_custom_call.1} parent=1 // pred_region
      %37 = dma.done [#allocation3], 128
    $region17: #{tpu_custom_call.1} parent=1 // pred_fallthru
      _
    // Predicated region
    $region18: #{tpu_custom_call.1} parent=1 // pred_check
      _
    $region19: #{tpu_custom_call.1} parent=1 // pred_check_branch
      %39 = sbr.rel (0) target = $region21
    $region20: #{tpu_custom_call.1} parent=1 // pred_region
      %40 = dma.done [#allocation6], 2048
    $region21: #{tpu_custom_call.1} parent=1 // pred_fallthru
      _
    %v41 = vld [vmem:[#allocation2] sm:$0xff]
    %v42 = vld [vmem:[#allocation5] sm:$0xff]
    %v43 = vld [vmem:[#allocation5 + $0x8] sm:$0xff]
    %v44 = vld [vmem:[#allocation5 + $0x10] sm:$0xff]
    %v45 = vld [vmem:[#allocation5 + $0x18] sm:$0xff]
    %v46 = vld [vmem:[%s2] sm:$0x1]
    %v48 = vlaneseq
    %v49 = vshrl.u32 %v48, 7
    %v50 = vsub.s32 0, %v49
    %v51 = vrot.slane %v46, %v50
    %vm53 = vcmask 261120
    %v55 = vsel %vm53, %v41, 0
    %v58 = vsel %vm53, %v42, 0
    %v61 = vsel %vm53, %v43, 0
    %v64 = vsel %vm53, %v44, 0
    %v67 = vsel %vm53, %v45, 0
    %69 = vmatprep.subr.mxu0 0.0
    %70 = vmatpush1.xpose.msra.mxu0 %v58
    %71 = vmatprep.subr.mxu0 0.0
    %72 = vmatpush1.xpose.msra.mxu0 %v61
    %73 = vmatprep.subr.mxu0 0.0
    %74 = vmatpush1.xpose.msra.mxu0 %v64
    %75 = vmatprep.subr.mxu0 0.0
    %76 = vmatpush1.xpose.msra.mxu0 %v67
    %77 = vmatprep.subr.mxu0 0.0
    %78 = vmatpush1.xpose.msra.mxu0 0.0
    %79 = vmatprep.subr.mxu0 0.0
    %80 = vmatpush1.xpose.msra.mxu0 0.0
    %81 = vmatprep.subr.mxu0 0.0
    %82 = vmatpush1.xpose.msra.mxu0 0.0
    %83 = vmatprep.subr.mxu0 0.0
    %84 = vmatpush1.xpose.msra.mxu0 0.0
    %85 = vmatprep.subr.mxu0 0.0
    %86 = vmatpush1.xpose.msra.mxu0 0.0
    %87 = vmatprep.subr.mxu0 0.0
    %88 = vmatpush1.xpose.msra.mxu0 0.0
    %89 = vmatprep.subr.mxu0 0.0
    %90 = vmatpush1.xpose.msra.mxu0 0.0
    %91 = vmatprep.subr.mxu0 0.0
    %92 = vmatpush1.xpose.msra.mxu0 0.0
    %93 = vmatprep.subr.mxu0 0.0
    %94 = vmatpush1.xpose.msra.mxu0 0.0
    %95 = vmatprep.subr.mxu0 0.0
    %96 = vmatpush1.xpose.msra.mxu0 0.0
    %97 = vmatprep.subr.mxu0 0.0
    %98 = vmatpush1.xpose.msra.mxu0 0.0
    %99 = vmatprep.subr.mxu0 0.0
    %100 = vmatpush1.xpose.msra.mxu0 0.0
    %101 = vmatprep.subr.mxu0 0.0
    %102 = vmatpush1.xpose.msra.mxu0 0.0
    %103 = vmatprep.subr.mxu0 0.0
    %104 = vmatpush1.xpose.msra.mxu0 0.0
    %105 = vmatprep.subr.mxu0 0.0
    %106 = vmatpush1.xpose.msra.mxu0 0.0
    %107 = vmatprep.subr.mxu0 0.0
    %108 = vmatpush1.xpose.msra.mxu0 0.0
    %109 = vmatprep.subr.mxu0 0.0
    %110 = vmatpush1.xpose.msra.mxu0 0.0
    %111 = vmatprep.subr.mxu0 0.0
    %112 = vmatpush1.xpose.msra.mxu0 0.0
    %113 = vmatprep.subr.mxu0 0.0
    %114 = vmatpush1.xpose.msra.mxu0 0.0
    %115 = vmatprep.subr.mxu0 0.0
    %116 = vmatpush1.xpose.msra.mxu0 0.0
    %117 = vmatprep.subr.mxu0 0.0
    %118 = vmatpush1.xpose.msra.mxu0 0.0
    %119 = vmatprep.subr.mxu0 0.0
    %120 = vmatpush1.xpose.msra.mxu0 0.0
    %121 = vmatprep.subr.mxu0 0.0
    %122 = vmatpush1.xpose.msra.mxu0 0.0
    %123 = vmatprep.subr.mxu0 0.0
    %124 = vmatpush1.xpose.msra.mxu0 0.0
    %125 = vmatprep.subr.mxu0 0.0
    %126 = vmatpush1.xpose.msra.mxu0 0.0
    %127 = vmatprep.subr.mxu0 0.0
    %128 = vmatpush1.xpose.msra.mxu0 0.0
    %129 = vmatprep.subr.mxu0 0.0
    %130 = vmatpush1.xpose.msra.mxu0 0.0
    %131 = vmatprep.subr.mxu0 0.0
    %132 = vmatpush1.xpose.msra.mxu0 0.0
    %133 = vmatprep.mubr.f32.mxu0 0.0
    %134 = vmatmul.mubr.f32.gmra.mrb[0].mxu0 %v55
    %v135 = vpop.f32.mrb[0].mxu0
    %v136 = vadd.f32 %v51, %v135
    %v137 = vpop.f32.mrb[0].mxu0
    %138 = vdwg.mxu0
    %139 = vst.msk [vmem:[#allocation7] sm:$0xff] %vm53, %v136
    %v140 = vld [vmem:[#allocation2] sm:$0xff]
    %s141 = scalar_lea.vmem [#allocation5], 32
    %v142 = vld [vmem:[%s141] sm:$0xff]
    %v143 = vld [vmem:[%s141 + $0x8] sm:$0xff]
    %v144 = vld [vmem:[%s141 + $0x10] sm:$0xff]
    %v145 = vld [vmem:[%s141 + $0x18] sm:$0xff]
    %s146 = scalar_lea.vmem %s2, 1
    %v147 = vld [vmem:[%s146] sm:$0x1]
    %v149 = vlaneseq
    %v150 = vshrl.u32 %v149, 7
    %v151 = vsub.s32 0, %v150
    %v152 = vrot.slane %v147, %v151
    %155 = vrot.lane.b32.xlu0 %v140, 96
    %v156 = vpop.permute.xlu0 %155
    %v157 = vsel %vm53, %v156, 0
    %v160 = vsel %vm53, %v142, 0
    %v163 = vsel %vm53, %v143, 0
    %v166 = vsel %vm53, %v144, 0
    %v169 = vsel %vm53, %v145, 0
    %171 = vmatprep.subr.mxu0 0.0
    %172 = vmatpush1.xpose.msra.mxu0 %v160
    %173 = vmatprep.subr.mxu0 0.0
    %174 = vmatpush1.xpose.msra.mxu0 %v163
    %175 = vmatprep.subr.mxu0 0.0
    %176 = vmatpush1.xpose.msra.mxu0 %v166
    %177 = vmatprep.subr.mxu0 0.0
    %178 = vmatpush1.xpose.msra.mxu0 %v169
    %179 = vmatprep.subr.mxu0 0.0
    %180 = vmatpush1.xpose.msra.mxu0 0.0
    %181 = vmatprep.subr.mxu0 0.0
    %182 = vmatpush1.xpose.msra.mxu0 0.0
    %183 = vmatprep.subr.mxu0 0.0
    %184 = vmatpush1.xpose.msra.mxu0 0.0
    %185 = vmatprep.subr.mxu0 0.0
    %186 = vmatpush1.xpose.msra.mxu0 0.0
    %187 = vmatprep.subr.mxu0 0.0
    %188 = vmatpush1.xpose.msra.mxu0 0.0
    %189 = vmatprep.subr.mxu0 0.0
    %190 = vmatpush1.xpose.msra.mxu0 0.0
    %191 = vmatprep.subr.mxu0 0.0
    %192 = vmatpush1.xpose.msra.mxu0 0.0
    %193 = vmatprep.subr.mxu0 0.0
    %194 = vmatpush1.xpose.msra.mxu0 0.0
    %195 = vmatprep.subr.mxu0 0.0
    %196 = vmatpush1.xpose.msra.mxu0 0.0
    %197 = vmatprep.subr.mxu0 0.0
    %198 = vmatpush1.xpose.msra.mxu0 0.0
    %199 = vmatprep.subr.mxu0 0.0
    %200 = vmatpush1.xpose.msra.mxu0 0.0
    %201 = vmatprep.subr.mxu0 0.0
    %202 = vmatpush1.xpose.msra.mxu0 0.0
    %203 = vmatprep.subr.mxu0 0.0
    %204 = vmatpush1.xpose.msra.mxu0 0.0
    %205 = vmatprep.subr.mxu0 0.0
    %206 = vmatpush1.xpose.msra.mxu0 0.0
    %207 = vmatprep.subr.mxu0 0.0
    %208 = vmatpush1.xpose.msra.mxu0 0.0
    %209 = vmatprep.subr.mxu0 0.0
    %210 = vmatpush1.xpose.msra.mxu0 0.0
    %211 = vmatprep.subr.mxu0 0.0
    %212 = vmatpush1.xpose.msra.mxu0 0.0
    %213 = vmatprep.subr.mxu0 0.0
    %214 = vmatpush1.xpose.msra.mxu0 0.0
    %215 = vmatprep.subr.mxu0 0.0
    %216 = vmatpush1.xpose.msra.mxu0 0.0
    %217 = vmatprep.subr.mxu0 0.0
    %218 = vmatpush1.xpose.msra.mxu0 0.0
    %219 = vmatprep.subr.mxu0 0.0
    %220 = vmatpush1.xpose.msra.mxu0 0.0
    %221 = vmatprep.subr.mxu0 0.0
    %222 = vmatpush1.xpose.msra.mxu0 0.0
    %223 = vmatprep.subr.mxu0 0.0
    %224 = vmatpush1.xpose.msra.mxu0 0.0
    %225 = vmatprep.subr.mxu0 0.0
    %226 = vmatpush1.xpose.msra.mxu0 0.0
    %227 = vmatprep.subr.mxu0 0.0
    %228 = vmatpush1.xpose.msra.mxu0 0.0
    %229 = vmatprep.subr.mxu0 0.0
    %230 = vmatpush1.xpose.msra.mxu0 0.0
    %231 = vmatprep.subr.mxu0 0.0
    %232 = vmatpush1.xpose.msra.mxu0 0.0
    %233 = vmatprep.subr.mxu0 0.0
    %234 = vmatpush1.xpose.msra.mxu0 0.0
    %235 = vmatprep.mubr.f32.mxu0 0.0
    %236 = vmatmul.mubr.f32.gmra.mrb[0].mxu0 %v157
    %v237 = vpop.f32.mrb[0].mxu0
    %v238 = vadd.f32 %v152, %v237
    %v239 = vpop.f32.mrb[0].mxu0
    %240 = vdwg.mxu0
    %s241 = scalar_lea.vmem [#allocation7], 8
    %242 = vst.msk [vmem:[%s241] sm:$0xff] %vm53, %v238
    %v243 = vld [vmem:[#allocation2] sm:$0xff]
    %s244 = scalar_lea.vmem [#allocation5], 64
    %v245 = vld [vmem:[%s244] sm:$0xff]
    %v246 = vld [vmem:[%s244 + $0x8] sm:$0xff]
    %v247 = vld [vmem:[%s244 + $0x10] sm:$0xff]
    %v248 = vld [vmem:[%s244 + $0x18] sm:$0xff]
    %s249 = scalar_lea.vmem %s2, 2
    %v250 = vld [vmem:[%s249] sm:$0x1]
    %v252 = vlaneseq
    %v253 = vshrl.u32 %v252, 7
    %v254 = vsub.s32 0, %v253
    %v255 = vrot.slane %v250, %v254
    %258 = vrot.lane.b32.xlu0 %v243, 64
    %v259 = vpop.permute.xlu0 %258
    %v260 = vsel %vm53, %v259, 0
    %v263 = vsel %vm53, %v245, 0
    %v266 = vsel %vm53, %v246, 0
    %v269 = vsel %vm53, %v247, 0
    %v272 = vsel %vm53, %v248, 0
    %274 = vmatprep.subr.mxu0 0.0
    %275 = vmatpush1.xpose.msra.mxu0 %v263
    %276 = vmatprep.subr.mxu0 0.0
    %277 = vmatpush1.xpose.msra.mxu0 %v266
    %278 = vmatprep.subr.mxu0 0.0
    %279 = vmatpush1.xpose.msra.mxu0 %v269
    %280 = vmatprep.subr.mxu0 0.0
    %281 = vmatpush1.xpose.msra.mxu0 %v272
    %282 = vmatprep.subr.mxu0 0.0
    %283 = vmatpush1.xpose.msra.mxu0 0.0
    %284 = vmatprep.subr.mxu0 0.0
    %285 = vmatpush1.xpose.msra.mxu0 0.0
    %286 = vmatprep.subr.mxu0 0.0
    %287 = vmatpush1.xpose.msra.mxu0 0.0
    %288 = vmatprep.subr.mxu0 0.0
    %289 = vmatpush1.xpose.msra.mxu0 0.0
    %290 = vmatprep.subr.mxu0 0.0
    %291 = vmatpush1.xpose.msra.mxu0 0.0
    %292 = vmatprep.subr.mxu0 0.0
    %293 = vmatpush1.xpose.msra.mxu0 0.0
    %294 = vmatprep.subr.mxu0 0.0
    %295 = vmatpush1.xpose.msra.mxu0 0.0
    %296 = vmatprep.subr.mxu0 0.0
    %297 = vmatpush1.xpose.msra.mxu0 0.0
    %298 = vmatprep.subr.mxu0 0.0
    %299 = vmatpush1.xpose.msra.mxu0 0.0
    %300 = vmatprep.subr.mxu0 0.0
    %301 = vmatpush1.xpose.msra.mxu0 0.0
    %302 = vmatprep.subr.mxu0 0.0
    %303 = vmatpush1.xpose.msra.mxu0 0.0
    %304 = vmatprep.subr.mxu0 0.0
    %305 = vmatpush1.xpose.msra.mxu0 0.0
    %306 = vmatprep.subr.mxu0 0.0
    %307 = vmatpush1.xpose.msra.mxu0 0.0
    %308 = vmatprep.subr.mxu0 0.0
    %309 = vmatpush1.xpose.msra.mxu0 0.0
    %310 = vmatprep.subr.mxu0 0.0
    %311 = vmatpush1.xpose.msra.mxu0 0.0
    %312 = vmatprep.subr.mxu0 0.0
    %313 = vmatpush1.xpose.msra.mxu0 0.0
    %314 = vmatprep.subr.mxu0 0.0
    %315 = vmatpush1.xpose.msra.mxu0 0.0
    %316 = vmatprep.subr.mxu0 0.0
    %317 = vmatpush1.xpose.msra.mxu0 0.0
    %318 = vmatprep.subr.mxu0 0.0
    %319 = vmatpush1.xpose.msra.mxu0 0.0
    %320 = vmatprep.subr.mxu0 0.0
    %321 = vmatpush1.xpose.msra.mxu0 0.0
    %322 = vmatprep.subr.mxu0 0.0
    %323 = vmatpush1.xpose.msra.mxu0 0.0
    %324 = vmatprep.subr.mxu0 0.0
    %325 = vmatpush1.xpose.msra.mxu0 0.0
    %326 = vmatprep.subr.mxu0 0.0
    %327 = vmatpush1.xpose.msra.mxu0 0.0
    %328 = vmatprep.subr.mxu0 0.0
    %329 = vmatpush1.xpose.msra.mxu0 0.0
    %330 = vmatprep.subr.mxu0 0.0
    %331 = vmatpush1.xpose.msra.mxu0 0.0
    %332 = vmatprep.subr.mxu0 0.0
    %333 = vmatpush1.xpose.msra.mxu0 0.0
    %334 = vmatprep.subr.mxu0 0.0
    %335 = vmatpush1.xpose.msra.mxu0 0.0
    %336 = vmatprep.subr.mxu0 0.0
    %337 = vmatpush1.xpose.msra.mxu0 0.0
    %338 = vmatprep.mubr.f32.mxu0 0.0
    %339 = vmatmul.mubr.f32.gmra.mrb[0].mxu0 %v260
    %v340 = vpop.f32.mrb[0].mxu0
    %v341 = vadd.f32 %v255, %v340
    %v342 = vpop.f32.mrb[0].mxu0
    %343 = vdwg.mxu0
    %s344 = scalar_lea.vmem [#allocation7], 16
    %345 = vst.msk [vmem:[%s344] sm:$0xff] %vm53, %v341
    %v346 = vld [vmem:[#allocation2] sm:$0xff]
    %s347 = scalar_lea.vmem [#allocation5], 96
    %v348 = vld [vmem:[%s347] sm:$0xff]
    %v349 = vld [vmem:[%s347 + $0x8] sm:$0xff]
    %v350 = vld [vmem:[%s347 + $0x10] sm:$0xff]
    %v351 = vld [vmem:[%s347 + $0x18] sm:$0xff]
    %s352 = scalar_lea.vmem %s2, 3
    %v353 = vld [vmem:[%s352] sm:$0x1]
    %v355 = vlaneseq
    %v356 = vshrl.u32 %v355, 7
    %v357 = vsub.s32 0, %v356
    %v358 = vrot.slane %v353, %v357
    %361 = vrot.lane.b32.xlu0 %v346, 32
    %v362 = vpop.permute.xlu0 %361
    %v363 = vsel %vm53, %v362, 0
    %v366 = vsel %vm53, %v348, 0
    %v369 = vsel %vm53, %v349, 0
    %v372 = vsel %vm53, %v350, 0
    %v375 = vsel %vm53, %v351, 0
    %377 = vmatprep.subr.mxu0 0.0
    %378 = vmatpush1.xpose.msra.mxu0 %v366
    %379 = vmatprep.subr.mxu0 0.0
    %380 = vmatpush1.xpose.msra.mxu0 %v369
    %381 = vmatprep.subr.mxu0 0.0
    %382 = vmatpush1.xpose.msra.mxu0 %v372
    %383 = vmatprep.subr.mxu0 0.0
    %384 = vmatpush1.xpose.msra.mxu0 %v375
    %385 = vmatprep.subr.mxu0 0.0
    %386 = vmatpush1.xpose.msra.mxu0 0.0
    %387 = vmatprep.subr.mxu0 0.0
    %388 = vmatpush1.xpose.msra.mxu0 0.0
    %389 = vmatprep.subr.mxu0 0.0
    %390 = vmatpush1.xpose.msra.mxu0 0.0
    %391 = vmatprep.subr.mxu0 0.0
    %392 = vmatpush1.xpose.msra.mxu0 0.0
    %393 = vmatprep.subr.mxu0 0.0
    %394 = vmatpush1.xpose.msra.mxu0 0.0
    %395 = vmatprep.subr.mxu0 0.0
    %396 = vmatpush1.xpose.msra.mxu0 0.0
    %397 = vmatprep.subr.mxu0 0.0
    %398 = vmatpush1.xpose.msra.mxu0 0.0
    %399 = vmatprep.subr.mxu0 0.0
    %400 = vmatpush1.xpose.msra.mxu0 0.0
    %401 = vmatprep.subr.mxu0 0.0
    %402 = vmatpush1.xpose.msra.mxu0 0.0
    %403 = vmatprep.subr.mxu0 0.0
    %404 = vmatpush1.xpose.msra.mxu0 0.0
    %405 = vmatprep.subr.mxu0 0.0
    %406 = vmatpush1.xpose.msra.mxu0 0.0
    %407 = vmatprep.subr.mxu0 0.0
    %408 = vmatpush1.xpose.msra.mxu0 0.0
    %409 = vmatprep.subr.mxu0 0.0
    %410 = vmatpush1.xpose.msra.mxu0 0.0
    %411 = vmatprep.subr.mxu0 0.0
    %412 = vmatpush1.xpose.msra.mxu0 0.0
    %413 = vmatprep.subr.mxu0 0.0
    %414 = vmatpush1.xpose.msra.mxu0 0.0
    %415 = vmatprep.subr.mxu0 0.0
    %416 = vmatpush1.xpose.msra.mxu0 0.0
    %417 = vmatprep.subr.mxu0 0.0
    %418 = vmatpush1.xpose.msra.mxu0 0.0
    %419 = vmatprep.subr.mxu0 0.0
    %420 = vmatpush1.xpose.msra.mxu0 0.0
    %421 = vmatprep.subr.mxu0 0.0
    %422 = vmatpush1.xpose.msra.mxu0 0.0
    %423 = vmatprep.subr.mxu0 0.0
    %424 = vmatpush1.xpose.msra.mxu0 0.0
    %425 = vmatprep.subr.mxu0 0.0
    %426 = vmatpush1.xpose.msra.mxu0 0.0
    %427 = vmatprep.subr.mxu0 0.0
    %428 = vmatpush1.xpose.msra.mxu0 0.0
    %429 = vmatprep.subr.mxu0 0.0
    %430 = vmatpush1.xpose.msra.mxu0 0.0
    %431 = vmatprep.subr.mxu0 0.0
    %432 = vmatpush1.xpose.msra.mxu0 0.0
    %433 = vmatprep.subr.mxu0 0.0
    %434 = vmatpush1.xpose.msra.mxu0 0.0
    %435 = vmatprep.subr.mxu0 0.0
    %436 = vmatpush1.xpose.msra.mxu0 0.0
    %437 = vmatprep.subr.mxu0 0.0
    %438 = vmatpush1.xpose.msra.mxu0 0.0
    %439 = vmatprep.subr.mxu0 0.0
    %440 = vmatpush1.xpose.msra.mxu0 0.0
    %441 = vmatprep.mubr.f32.mxu0 0.0
    %442 = vmatmul.mubr.f32.gmra.mrb[0].mxu0 %v363
    %v443 = vpop.f32.mrb[0].mxu0
    %v444 = vadd.f32 %v358, %v443
    %v445 = vpop.f32.mrb[0].mxu0
    %446 = vdwg.mxu0
    %s447 = scalar_lea.vmem [#allocation7], 24
    %448 = vst.msk [vmem:[%s447] sm:$0xff] %vm53, %v444
    // Predicated region
    $region22: #{tpu_custom_call.1} parent=1 // pred_check
      _
    $region23: #{tpu_custom_call.1} parent=1 // pred_check_branch
      %450 = sbr.rel (0) target = $region25
    $region24: #{tpu_custom_call.1} parent=1 // pred_region
      %s452 = ssub.s32 512, 512
      %453 = vsyncadd [#allocation4], %s452
      %s454 = sshll.u32 [#allocation7], 4
      %s455 = int_to_ptr.vmem [resolvable:$true] %s454
      %460 = dma.vmem_to_hbm [thread:$0]  %s455, 512, %s3, [#allocation4], 128, 128, 8
    $region25: #{tpu_custom_call.1} parent=1 // pred_fallthru
      _
    // Predicated region
    $region26: #{tpu_custom_call.1} parent=1 // pred_check
      _
    $region27: #{tpu_custom_call.1} parent=1 // pred_check_branch
      %462 = sbr.rel (0) target = $region29
    $region28: #{tpu_custom_call.1} parent=1 // pred_region
      %463 = dma.done [#allocation4], 512
    $region29: #{tpu_custom_call.1} parent=1 // pred_fallthru
      _
    %464 = vsyncpa [#allocation3], 1
    %465 = vsyncpa [#allocation6], 1
    %466 = vsyncpa [#allocation4], 1

</llo_original>
